<compile_context>
chip_gen: v7x
topology: tpu7x:2x2x1
jax: 0.10.0
libtpu: 0.0.40
codegen_flags: <defaults>
</compile_context>

<pallas_src>
import math

import jax
import jax.numpy as jnp
from jax.experimental import pallas as pl
from jax.experimental.pallas import tpu as pltpu

_LANE = 128          # lane width / MXU-friendly feature padding
_SUBLANE = 8         # sublane granularity for the batch tile
_MAX_TB = 512        # batch tile size for large batches (~85% of HBM roofline)


def _round_up(n, m):
    return ((n + m - 1) // m) * m


def _leaky_relu(v, negative_slope=0.01):
    # Matches torch.nn.functional.leaky_relu default (slope 0.01).
    return jnp.where(v > 0, v, negative_slope * v)


def ann_cc_kernel(x_ref, w_in_ref, b_in_ref, w_h_ref, b_h_ref, w_out_ref, b_out_ref, o_ref):
    """Fused MLP forward for one (TB, in_p) batch tile; weights stay resident in VMEM."""
    x = x_ref[...]  # already f32 (cast handled in the wrapper)

    # input_layer + leaky_relu
    h = jnp.dot(x, w_in_ref[...], preferred_element_type=jnp.float32) + b_in_ref[...]
    h = _leaky_relu(h)

    # hidden_layer applied three times (shared weights), leaky_relu after each.
    # 3 iterations -> unrolled Python loop is fine (weights loaded once).
    w_h = w_h_ref[...]
    b_h = b_h_ref[...]
    for _ in range(3):
        h = jnp.dot(h, w_h, preferred_element_type=jnp.float32) + b_h
        h = _leaky_relu(h)

    # output_layer (no activation); lane-dense (padded-to-128) store
    out = jnp.dot(h, w_out_ref[...], preferred_element_type=jnp.float32) + b_out_ref[...]
    o_ref[...] = out.astype(o_ref.dtype)


def ann_cc_forward(x, params):
    """Pad to lane-dense shapes, grid over batch, run the fused kernel, un-pad."""
    w_in, b_in, w_h, b_h, w_out, b_out = params
    batch, in_neuron = x.shape
    hidden_neuron = w_h.shape[0]
    out_neuron = w_out.shape[1]

    # Padded (lane-dense) feature dims.
    in_p = _round_up(in_neuron, _LANE)
    hid_p = _round_up(hidden_neuron, _LANE)
    out_p = _round_up(out_neuron, _LANE)

    # Batch tile: whole (sublane-rounded) batch if small, else _MAX_TB rows.
    tb = min(_MAX_TB, _round_up(batch, _SUBLANE))
    batch_p = _round_up(batch, tb)
    n_tiles = batch_p // tb

    f32 = jnp.float32
    x_p = jnp.zeros((batch_p, in_p), f32).at[:batch, :in_neuron].set(x.astype(f32))

    def pad2(a, r, c):
        return jnp.zeros((r, c), f32).at[: a.shape[0], : a.shape[1]].set(a.astype(f32))

    w_in_p = pad2(w_in, in_p, hid_p)
    b_in_p = pad2(b_in, 1, hid_p)
    w_h_p = pad2(w_h, hid_p, hid_p)
    b_h_p = pad2(b_h, 1, hid_p)
    w_out_p = pad2(w_out, hid_p, out_p)
    b_out_p = pad2(b_out, 1, out_p)

    # Weights/biases: same block for every grid step -> kept resident in VMEM.
    resident = lambda shape: pl.BlockSpec(shape, lambda i: (0, 0))

    out_padded = pl.pallas_call(
        ann_cc_kernel,
        out_shape=jax.ShapeDtypeStruct((batch_p, out_p), x.dtype),
        grid=(n_tiles,),
        in_specs=[
            pl.BlockSpec((tb, in_p), lambda i: (i, 0)),   # x: batch-tiled, double-buffered
            resident((in_p, hid_p)),
            resident((1, hid_p)),
            resident((hid_p, hid_p)),
            resident((1, hid_p)),
            resident((hid_p, out_p)),
            resident((1, out_p)),
        ],
        out_specs=pl.BlockSpec((tb, out_p), lambda i: (i, 0)),
        compiler_params=pltpu.CompilerParams(
            dimension_semantics=("parallel",),  # v7x: shard batch tiles across 2 TCs
        ),
    )(x_p, w_in_p, b_in_p, w_h_p, b_h_p, w_out_p, b_out_p)

    return out_padded[:batch, :out_neuron]


def init_params(key, in_neuron, hidden_neuron, out_neuron, dtype=jnp.float32):
    """Deterministic init mimicking nn.Linear default (U[-1/sqrt(fan_in), 1/sqrt(fan_in)]).

    Weights stored as [fan_in, fan_out]; biases as [1, fan_out] (2D for TPU layout)."""
    ks = jax.random.split(key, 6)

    def linear(kw, kb, fan_in, fan_out):
        bound = 1.0 / math.sqrt(fan_in)
        w = jax.random.uniform(kw, (fan_in, fan_out), dtype, -bound, bound)
        b = jax.random.uniform(kb, (1, fan_out), dtype, -bound, bound)
        return w, b

    w_in, b_in = linear(ks[0], ks[1], in_neuron, hidden_neuron)
    w_h, b_h = linear(ks[2], ks[3], hidden_neuron, hidden_neuron)
    w_out, b_out = linear(ks[4], ks[5], hidden_neuron, out_neuron)
    return (w_in, b_in, w_h, b_h, w_out, b_out)


def reference_forward(x, params):
    """Pure-JAX reference of the same forward pass (for correctness check)."""
    w_in, b_in, w_h, b_h, w_out, b_out = params
    h = _leaky_relu(x @ w_in + b_in)
    for _ in range(3):
        h = _leaky_relu(h @ w_h + b_h)
    return h @ w_out + b_out


if __name__ == "__main__":
    key = jax.random.PRNGKey(0)
    k_x, k_p = jax.random.split(key)

    batch, in_neuron, hidden_neuron, out_neuron = 8, 16, 32, 4
    x = jax.random.normal(k_x, (batch, in_neuron), jnp.float32)
    params = init_params(k_p, in_neuron, hidden_neuron, out_neuron)

    out = ann_cc_forward(x, params)
    out = jax.block_until_ready(out)

    ref = reference_forward(x, params)
    assert out.shape == (batch, out_neuron)
    assert jnp.allclose(out, ref, atol=1e-5, rtol=1e-5)

    print("KERNEL_OK")
</pallas_src>

<mosaic_0001>
module attributes {stable_mosaic.version = 11 : i64} {
  func.func @ann_cc_kernel(%arg0: i32, %arg1: memref<8x128xf32, #tpu.memory_space<vmem>>, %arg2: memref<128x128xf32, #tpu.memory_space<vmem>>, %arg3: memref<1x128xf32, #tpu.memory_space<vmem>>, %arg4: memref<128x128xf32, #tpu.memory_space<vmem>>, %arg5: memref<1x128xf32, #tpu.memory_space<vmem>>, %arg6: memref<128x128xf32, #tpu.memory_space<vmem>>, %arg7: memref<1x128xf32, #tpu.memory_space<vmem>>, %arg8: memref<8x128xf32, #tpu.memory_space<vmem>>) attributes {dimension_semantics = [#tpu.dimension_semantics<parallel>], iteration_bounds = array<i64: 1>, scalar_prefetch = 0 : i64, scratch_operands = 0 : i64, tpu.core_type = #tpu.core_type<tc>, window_params = [{transform_indices = @transform_0, window_bounds = array<i64: 8, 128>}, {pipeline_mode = #tpu.pipeline_mode<synchronous>, transform_indices = @transform_1, window_bounds = array<i64: 128, 128>}, {pipeline_mode = #tpu.pipeline_mode<synchronous>, transform_indices = @transform_2, window_bounds = array<i64: 1, 128>}, {pipeline_mode = #tpu.pipeline_mode<synchronous>, transform_indices = @transform_3, window_bounds = array<i64: 128, 128>}, {pipeline_mode = #tpu.pipeline_mode<synchronous>, transform_indices = @transform_4, window_bounds = array<i64: 1, 128>}, {pipeline_mode = #tpu.pipeline_mode<synchronous>, transform_indices = @transform_5, window_bounds = array<i64: 128, 128>}, {pipeline_mode = #tpu.pipeline_mode<synchronous>, transform_indices = @transform_6, window_bounds = array<i64: 1, 128>}, {transform_indices = @transform_7, window_bounds = array<i64: 8, 128>}]} {
    %c0 = arith.constant 0 : index
    %c0_0 = arith.constant 0 : index
    %0 = vector.load %arg1[%c0, %c0_0] : memref<8x128xf32, #tpu.memory_space<vmem>>, vector<8x128xf32>
    %c0_1 = arith.constant 0 : index
    %c0_2 = arith.constant 0 : index
    %1 = vector.load %arg2[%c0_1, %c0_2] : memref<128x128xf32, #tpu.memory_space<vmem>>, vector<128x128xf32>
    %cst = arith.constant dense<0.000000e+00> : vector<8x128xf32>
    %2 = tpu.matmul %0, %1, %cst {dimension_numbers = #tpu.dot_dimension_numbers<[1], [0], [0], [1], [0, 0, 1, 1], [], []>} : vector<8x128xf32>, vector<128x128xf32>, vector<8x128xf32> -> vector<8x128xf32>
    %c0_3 = arith.constant 0 : index
    %c0_4 = arith.constant 0 : index
    %3 = vector.load %arg3[%c0_3, %c0_4] : memref<1x128xf32, #tpu.memory_space<vmem>>, vector<1x128xf32>
    %4 = vector.broadcast %3 : vector<1x128xf32> to vector<8x128xf32>
    %5 = arith.addf %2, %4 : vector<8x128xf32>
    %cst_5 = arith.constant 0.000000e+00 : f32
    %6 = vector.broadcast %cst_5 : f32 to vector<8x128xf32>
    %7 = arith.cmpf ogt, %5, %6 : vector<8x128xf32>
    %cst_6 = arith.constant 0.00999999977 : f32
    %8 = vector.broadcast %cst_6 : f32 to vector<8x128xf32>
    %9 = arith.mulf %8, %5 : vector<8x128xf32>
    %10 = arith.select %7, %5, %9 : vector<8x128xi1>, vector<8x128xf32>
    %c0_7 = arith.constant 0 : index
    %c0_8 = arith.constant 0 : index
    %11 = vector.load %arg4[%c0_7, %c0_8] : memref<128x128xf32, #tpu.memory_space<vmem>>, vector<128x128xf32>
    %c0_9 = arith.constant 0 : index
    %c0_10 = arith.constant 0 : index
    %12 = vector.load %arg5[%c0_9, %c0_10] : memref<1x128xf32, #tpu.memory_space<vmem>>, vector<1x128xf32>
    %cst_11 = arith.constant dense<0.000000e+00> : vector<8x128xf32>
    %13 = tpu.matmul %10, %11, %cst_11 {dimension_numbers = #tpu.dot_dimension_numbers<[1], [0], [0], [1], [0, 0, 1, 1], [], []>} : vector<8x128xf32>, vector<128x128xf32>, vector<8x128xf32> -> vector<8x128xf32>
    %14 = vector.broadcast %12 : vector<1x128xf32> to vector<8x128xf32>
    %15 = arith.addf %13, %14 : vector<8x128xf32>
    %cst_12 = arith.constant 0.000000e+00 : f32
    %16 = vector.broadcast %cst_12 : f32 to vector<8x128xf32>
    %17 = arith.cmpf ogt, %15, %16 : vector<8x128xf32>
    %cst_13 = arith.constant 0.00999999977 : f32
    %18 = vector.broadcast %cst_13 : f32 to vector<8x128xf32>
    %19 = arith.mulf %18, %15 : vector<8x128xf32>
    %20 = arith.select %17, %15, %19 : vector<8x128xi1>, vector<8x128xf32>
    %cst_14 = arith.constant dense<0.000000e+00> : vector<8x128xf32>
    %21 = tpu.matmul %20, %11, %cst_14 {dimension_numbers = #tpu.dot_dimension_numbers<[1], [0], [0], [1], [0, 0, 1, 1], [], []>} : vector<8x128xf32>, vector<128x128xf32>, vector<8x128xf32> -> vector<8x128xf32>
    %22 = vector.broadcast %12 : vector<1x128xf32> to vector<8x128xf32>
    %23 = arith.addf %21, %22 : vector<8x128xf32>
    %cst_15 = arith.constant 0.000000e+00 : f32
    %24 = vector.broadcast %cst_15 : f32 to vector<8x128xf32>
    %25 = arith.cmpf ogt, %23, %24 : vector<8x128xf32>
    %cst_16 = arith.constant 0.00999999977 : f32
    %26 = vector.broadcast %cst_16 : f32 to vector<8x128xf32>
    %27 = arith.mulf %26, %23 : vector<8x128xf32>
    %28 = arith.select %25, %23, %27 : vector<8x128xi1>, vector<8x128xf32>
    %cst_17 = arith.constant dense<0.000000e+00> : vector<8x128xf32>
    %29 = tpu.matmul %28, %11, %cst_17 {dimension_numbers = #tpu.dot_dimension_numbers<[1], [0], [0], [1], [0, 0, 1, 1], [], []>} : vector<8x128xf32>, vector<128x128xf32>, vector<8x128xf32> -> vector<8x128xf32>
    %30 = vector.broadcast %12 : vector<1x128xf32> to vector<8x128xf32>
    %31 = arith.addf %29, %30 : vector<8x128xf32>
    %cst_18 = arith.constant 0.000000e+00 : f32
    %32 = vector.broadcast %cst_18 : f32 to vector<8x128xf32>
    %33 = arith.cmpf ogt, %31, %32 : vector<8x128xf32>
    %cst_19 = arith.constant 0.00999999977 : f32
    %34 = vector.broadcast %cst_19 : f32 to vector<8x128xf32>
    %35 = arith.mulf %34, %31 : vector<8x128xf32>
    %36 = arith.select %33, %31, %35 : vector<8x128xi1>, vector<8x128xf32>
    %c0_20 = arith.constant 0 : index
    %c0_21 = arith.constant 0 : index
    %37 = vector.load %arg6[%c0_20, %c0_21] : memref<128x128xf32, #tpu.memory_space<vmem>>, vector<128x128xf32>
    %cst_22 = arith.constant dense<0.000000e+00> : vector<8x128xf32>
    %38 = tpu.matmul %36, %37, %cst_22 {dimension_numbers = #tpu.dot_dimension_numbers<[1], [0], [0], [1], [0, 0, 1, 1], [], []>} : vector<8x128xf32>, vector<128x128xf32>, vector<8x128xf32> -> vector<8x128xf32>
    %c0_23 = arith.constant 0 : index
    %c0_24 = arith.constant 0 : index
    %39 = vector.load %arg7[%c0_23, %c0_24] : memref<1x128xf32, #tpu.memory_space<vmem>>, vector<1x128xf32>
    %40 = vector.broadcast %39 : vector<1x128xf32> to vector<8x128xf32>
    %41 = arith.addf %38, %40 : vector<8x128xf32>
    %c0_25 = arith.constant 0 : index
    %c0_26 = arith.constant 0 : index
    %42 = vector.load %arg8[%c0_25, %c0_26] : memref<8x128xf32, #tpu.memory_space<vmem>>, vector<8x128xf32>
    tpu.vector_store %arg8[%c0_25, %c0_26], %41 {strides = array<i32>} : memref<8x128xf32, #tpu.memory_space<vmem>>, vector<8x128xf32>,
    return
  }
  func.func @transform_0(%arg0: i32) -> (i32, i32) {
    %c0_i32 = arith.constant 0 : i32
    %c0_i32_0 = arith.constant 0 : i32
    return %arg0, %c0_i32 : i32, i32
  }
  func.func @transform_1(%arg0: i32) -> (i32, i32) {
    %c0_i32 = arith.constant 0 : i32
    %c0_i32_0 = arith.constant 0 : i32
    %c0_i32_1 = arith.constant 0 : i32
    return %c0_i32, %c0_i32_0 : i32, i32
  }
  func.func @transform_2(%arg0: i32) -> (i32, i32) {
    %c0_i32 = arith.constant 0 : i32
    %c0_i32_0 = arith.constant 0 : i32
    %c0_i32_1 = arith.constant 0 : i32
    return %c0_i32, %c0_i32_0 : i32, i32
  }
  func.func @transform_3(%arg0: i32) -> (i32, i32) {
    %c0_i32 = arith.constant 0 : i32
    %c0_i32_0 = arith.constant 0 : i32
    %c0_i32_1 = arith.constant 0 : i32
    return %c0_i32, %c0_i32_0 : i32, i32
  }
  func.func @transform_4(%arg0: i32) -> (i32, i32) {
    %c0_i32 = arith.constant 0 : i32
    %c0_i32_0 = arith.constant 0 : i32
    %c0_i32_1 = arith.constant 0 : i32
    return %c0_i32, %c0_i32_0 : i32, i32
  }
  func.func @transform_5(%arg0: i32) -> (i32, i32) {
    %c0_i32 = arith.constant 0 : i32
    %c0_i32_0 = arith.constant 0 : i32
    %c0_i32_1 = arith.constant 0 : i32
    return %c0_i32, %c0_i32_0 : i32, i32
  }
  func.func @transform_6(%arg0: i32) -> (i32, i32) {
    %c0_i32 = arith.constant 0 : i32
    %c0_i32_0 = arith.constant 0 : i32
    %c0_i32_1 = arith.constant 0 : i32
    return %c0_i32, %c0_i32_0 : i32, i32
  }
  func.func @transform_7(%arg0: i32) -> (i32, i32) {
    %c0_i32 = arith.constant 0 : i32
    %c0_i32_0 = arith.constant 0 : i32
    return %arg0, %c0_i32 : i32, i32
  }
}

</mosaic_0001>

<llo_original>
// kernel: tpu_custom_call.1
$region0: #{tpu_custom_call.1}
  #allocation0 [shape = 'u32[]', space=smem, size = 0x4, offset = 0x4, fixed_abs, tag = 'smem constant byte address 0x4 - core index']
  #allocation1 [shape = 'u32[144,128]{1,0:T(1,128)}', space=vmem, size = 0x12000, scoped, tag = 'internal scratch']
  %s0 = inlined_call_operand.hbm [shape: f32[8,128], index: 0, kind: input, shape index: {}]
  %s1 = inlined_call_operand.hbm [shape: f32[128,128], index: 1, kind: input, shape index: {}]
  %s2 = inlined_call_operand.vmem [shape: f32[1,128], index: 2, kind: input, shape index: {}]
  %s3 = inlined_call_operand.hbm [shape: f32[128,128], index: 3, kind: input, shape index: {}]
  %s4 = inlined_call_operand.vmem [shape: f32[1,128], index: 4, kind: input, shape index: {}]
  %s5 = inlined_call_operand.hbm [shape: f32[128,128], index: 5, kind: input, shape index: {}]
  %s6 = inlined_call_operand.vmem [shape: f32[1,128], index: 6, kind: input, shape index: {}]
  %s7 = inlined_call_operand.hbm [shape: f32[8,128], index: 7, kind: output, shape index: {}]
  %s8 = sld [smem:[#allocation0]]
  $region54: #{tpu_custom_call.1} parent=0
    _
  %s10 = ssub.s32 1, %s8
  %s11 = scalar_select 0, %s10, %s8
  $region1: #{tpu_custom_call.1} parent=0
    #allocation2 [shape = 'u8[4096]{0}', space=vmem, size = 0x1000, scoped, tag = 'input window, operand 0, single buffered']
    #allocation3 [shape = 's32[1]{0}', space=sflag, size = 0x4, scoped, tag = 'scoped memory for tpu_custom_call.1']
    #allocation4 [shape = 's32[1]{0}', space=sflag, size = 0x4, scoped, tag = 'scoped memory for tpu_custom_call.1']
    #allocation5 [shape = 'u8[65536]{0}', space=vmem, size = 0x10000, scoped, tag = 'input window, operand 1, single buffered']
    #allocation6 [shape = 's32[1]{0}', space=sflag, size = 0x4, scoped, tag = 'scoped memory for tpu_custom_call.1']
    #allocation7 [shape = 'u8[65536]{0}', space=vmem, size = 0x10000, scoped, tag = 'input window, operand 3, single buffered']
    #allocation8 [shape = 'u8[65536]{0}', space=vmem, size = 0x10000, scoped, tag = 'input window, operand 5, single buffered']
    #allocation9 [shape = 's32[1]{0}', space=sflag, size = 0x4, scoped, tag = 'scoped memory for tpu_custom_call.1']
    #allocation10 [shape = 'u8[4096]{0}', space=vmem, size = 0x1000, scoped, tag = 'output window, operand 0, single buffered']
    %12 = vsyncpa [#allocation3], 0
    %13 = vsyncpa [#allocation6], 0
    %14 = vsyncpa [#allocation9], 0
    %15 = vsyncpa [#allocation4], 0
    // Predicated region
    $region2: #{tpu_custom_call.1} parent=1 // pred_check
      _
    $region3: #{tpu_custom_call.1} parent=1 // pred_check_branch
      %17 = sbr.rel (0) target = $region5
    $region4: #{tpu_custom_call.1} parent=1 // pred_region
      %s19 = ssub.s32 128, 128
      %20 = vsyncadd [#allocation3], %s19
      %s22 = sshll.u32 [#allocation2], 4
      %s23 = int_to_ptr.vmem [resolvable:$true] %s22
      %25 = dma.hbm_to_vmem [thread:$0]  %s0, 128, %s23, [#allocation3]
    $region5: #{tpu_custom_call.1} parent=1 // pred_fallthru
      _
    // Predicated region
    $region6: #{tpu_custom_call.1} parent=1 // pred_check
      _
    $region7: #{tpu_custom_call.1} parent=1 // pred_check_branch
      %27 = sbr.rel (0) target = $region9
    $region8: #{tpu_custom_call.1} parent=1 // pred_region
      %s29 = ssub.s32 2048, 2048
      %30 = vsyncadd [#allocation6], %s29
      %s31 = sshll.u32 [#allocation5], 4
      %s32 = int_to_ptr.vmem [resolvable:$true] %s31
      %37 = dma.hbm_to_vmem [thread:$0]  %s1, 2048, %s32, [#allocation6], 128, 128, 8
    $region9: #{tpu_custom_call.1} parent=1 // pred_fallthru
      _
    // Predicated region
    $region10: #{tpu_custom_call.1} parent=1 // pred_check
      _
    $region11: #{tpu_custom_call.1} parent=1 // pred_check_branch
      %39 = sbr.rel (0) target = $region13
    $region12: #{tpu_custom_call.1} parent=1 // pred_region
      _
    $region13: #{tpu_custom_call.1} parent=1 // pred_fallthru
      _
    // Predicated region
    $region14: #{tpu_custom_call.1} parent=1 // pred_check
      _
    $region15: #{tpu_custom_call.1} parent=1 // pred_check_branch
      %41 = sbr.rel (0) target = $region17
    $region16: #{tpu_custom_call.1} parent=1 // pred_region
      %s43 = ssub.s32 2048, 2048
      %44 = vsyncadd [#allocation6], %s43
      %s45 = sshll.u32 [#allocation7], 4
      %s46 = int_to_ptr.vmem [resolvable:$true] %s45
      %51 = dma.hbm_to_vmem [thread:$0]  %s3, 2048, %s46, [#allocation6], 128, 128, 8
    $region17: #{tpu_custom_call.1} parent=1 // pred_fallthru
      _
    // Predicated region
    $region18: #{tpu_custom_call.1} parent=1 // pred_check
      _
    $region19: #{tpu_custom_call.1} parent=1 // pred_check_branch
      %53 = sbr.rel (0) target = $region21
    $region20: #{tpu_custom_call.1} parent=1 // pred_region
      _
    $region21: #{tpu_custom_call.1} parent=1 // pred_fallthru
      _
    // Predicated region
    $region22: #{tpu_custom_call.1} parent=1 // pred_check
      _
    $region23: #{tpu_custom_call.1} parent=1 // pred_check_branch
      %55 = sbr.rel (0) target = $region25
    $region24: #{tpu_custom_call.1} parent=1 // pred_region
      %s57 = ssub.s32 2048, 2048
      %58 = vsyncadd [#allocation9], %s57
      %s59 = sshll.u32 [#allocation8], 4
      %s60 = int_to_ptr.vmem [resolvable:$true] %s59
      %65 = dma.hbm_to_vmem [thread:$0]  %s5, 2048, %s60, [#allocation9], 128, 128, 8
    $region25: #{tpu_custom_call.1} parent=1 // pred_fallthru
      _
    // Predicated region
    $region26: #{tpu_custom_call.1} parent=1 // pred_check
      _
    $region27: #{tpu_custom_call.1} parent=1 // pred_check_branch
      %67 = sbr.rel (0) target = $region29
    $region28: #{tpu_custom_call.1} parent=1 // pred_region
      _
    $region29: #{tpu_custom_call.1} parent=1 // pred_fallthru
      _
    // Predicated region
    $region30: #{tpu_custom_call.1} parent=1 // pred_check
      _
    $region31: #{tpu_custom_call.1} parent=1 // pred_check_branch
      %69 = sbr.rel (0) target = $region33
    $region32: #{tpu_custom_call.1} parent=1 // pred_region
      %70 = dma.done [#allocation3], 128
    $region33: #{tpu_custom_call.1} parent=1 // pred_fallthru
      _
    // Predicated region
    $region34: #{tpu_custom_call.1} parent=1 // pred_check
      _
    $region35: #{tpu_custom_call.1} parent=1 // pred_check_branch
      %72 = sbr.rel (0) target = $region37
    $region36: #{tpu_custom_call.1} parent=1 // pred_region
      %73 = dma.done [#allocation6], 2048
    $region37: #{tpu_custom_call.1} parent=1 // pred_fallthru
      _
    // Predicated region
    $region38: #{tpu_custom_call.1} parent=1 // pred_check
      _
    $region39: #{tpu_custom_call.1} parent=1 // pred_check_branch
      %75 = sbr.rel (0) target = $region41
    $region40: #{tpu_custom_call.1} parent=1 // pred_region
      %76 = dma.done [#allocation6], 2048
    $region41: #{tpu_custom_call.1} parent=1 // pred_fallthru
      _
    // Predicated region
    $region42: #{tpu_custom_call.1} parent=1 // pred_check
      _
    $region43: #{tpu_custom_call.1} parent=1 // pred_check_branch
      %78 = sbr.rel (0) target = $region45
    $region44: #{tpu_custom_call.1} parent=1 // pred_region
      %79 = dma.done [#allocation9], 2048
    $region45: #{tpu_custom_call.1} parent=1 // pred_fallthru
      _
    %v80 = vld [vmem:[#allocation2] sm:$0xff]
    %v81 = vld [vmem:[#allocation5] sm:$0xff]
    %v82 = vld [vmem:[#allocation5 + $0x8] sm:$0xff]
    %v83 = vld [vmem:[#allocation5 + $0x10] sm:$0xff]
    %v84 = vld [vmem:[#allocation5 + $0x18] sm:$0xff]
    %v85 = vld [vmem:[#allocation5 + $0x20] sm:$0xff]
    %v86 = vld [vmem:[#allocation5 + $0x28] sm:$0xff]
    %v87 = vld [vmem:[#allocation5 + $0x30] sm:$0xff]
    %v88 = vld [vmem:[#allocation5 + $0x38] sm:$0xff]
    %v89 = vld [vmem:[#allocation5 + $0x40] sm:$0xff]
    %v90 = vld [vmem:[#allocation5 + $0x48] sm:$0xff]
    %v91 = vld [vmem:[#allocation5 + $0x50] sm:$0xff]
    %v92 = vld [vmem:[#allocation5 + $0x58] sm:$0xff]
    %v93 = vld [vmem:[#allocation5 + $0x60] sm:$0xff]
    %v94 = vld [vmem:[#allocation5 + $0x68] sm:$0xff]
    %v95 = vld [vmem:[#allocation5 + $0x70] sm:$0xff]
    %v96 = vld [vmem:[#allocation5 + $0x78] sm:$0xff]
    %v97 = vld [vmem:[%s2] sm:$0x1]
    %v99 = vlaneseq
    %v100 = vshrl.u32 %v99, 7
    %v101 = vsub.s32 0, %v100
    %v102 = vrot.slane %v97, %v101
    %104 = vmatprep.subr.mxu0 0.0
    %105 = vmatpush1.msra.mxu0 %v81
    %106 = vmatprep.subr.mxu0 0.0
    %107 = vmatpush1.msra.mxu0 %v82
    %108 = vmatprep.subr.mxu0 0.0
    %109 = vmatpush1.msra.mxu0 %v83
    %110 = vmatprep.subr.mxu0 0.0
    %111 = vmatpush1.msra.mxu0 %v84
    %112 = vmatprep.subr.mxu0 0.0
    %113 = vmatpush1.msra.mxu0 %v85
    %114 = vmatprep.subr.mxu0 0.0
    %115 = vmatpush1.msra.mxu0 %v86
    %116 = vmatprep.subr.mxu0 0.0
    %117 = vmatpush1.msra.mxu0 %v87
    %118 = vmatprep.subr.mxu0 0.0
    %119 = vmatpush1.msra.mxu0 %v88
    %120 = vmatprep.subr.mxu0 0.0
    %121 = vmatpush1.msra.mxu0 %v89
    %122 = vmatprep.subr.mxu0 0.0
    %123 = vmatpush1.msra.mxu0 %v90
    %124 = vmatprep.subr.mxu0 0.0
    %125 = vmatpush1.msra.mxu0 %v91
    %126 = vmatprep.subr.mxu0 0.0
    %127 = vmatpush1.msra.mxu0 %v92
    %128 = vmatprep.subr.mxu0 0.0
    %129 = vmatpush1.msra.mxu0 %v93
    %130 = vmatprep.subr.mxu0 0.0
    %131 = vmatpush1.msra.mxu0 %v94
    %132 = vmatprep.subr.mxu0 0.0
    %133 = vmatpush1.msra.mxu0 %v95
    %134 = vmatprep.subr.mxu0 0.0
    %135 = vmatpush1.msra.mxu0 %v96
    %136 = vmatprep.subr.mxu0 0.0
    %137 = vmatpush1.msra.mxu0 0.0
    %138 = vmatprep.subr.mxu0 0.0
    %139 = vmatpush1.msra.mxu0 0.0
    %140 = vmatprep.subr.mxu0 0.0
    %141 = vmatpush1.msra.mxu0 0.0
    %142 = vmatprep.subr.mxu0 0.0
    %143 = vmatpush1.msra.mxu0 0.0
    %144 = vmatprep.subr.mxu0 0.0
    %145 = vmatpush1.msra.mxu0 0.0
    %146 = vmatprep.subr.mxu0 0.0
    %147 = vmatpush1.msra.mxu0 0.0
    %148 = vmatprep.subr.mxu0 0.0
    %149 = vmatpush1.msra.mxu0 0.0
    %150 = vmatprep.subr.mxu0 0.0
    %151 = vmatpush1.msra.mxu0 0.0
    %152 = vmatprep.subr.mxu0 0.0
    %153 = vmatpush1.msra.mxu0 0.0
    %154 = vmatprep.subr.mxu0 0.0
    %155 = vmatpush1.msra.mxu0 0.0
    %156 = vmatprep.subr.mxu0 0.0
    %157 = vmatpush1.msra.mxu0 0.0
    %158 = vmatprep.subr.mxu0 0.0
    %159 = vmatpush1.msra.mxu0 0.0
    %160 = vmatprep.subr.mxu0 0.0
    %161 = vmatpush1.msra.mxu0 0.0
    %162 = vmatprep.subr.mxu0 0.0
    %163 = vmatpush1.msra.mxu0 0.0
    %164 = vmatprep.subr.mxu0 0.0
    %165 = vmatpush1.msra.mxu0 0.0
    %166 = vmatprep.subr.mxu0 0.0
    %167 = vmatpush1.msra.mxu0 0.0
    %168 = vmatprep.mubr.f32.mxu0 0.0
    %169 = vmatmul.mubr.f32.gmra.mrb[0].mxu0 %v80
    %v170 = vpop.f32.mrb[0].mxu0
    %v171 = vadd.f32 %v102, %v170
    %v172 = vpop.f32.mrb[0].mxu0
    %173 = vdwg.mxu0
    %vm174 = vcmp.gt.f32.partialorder %v171, 0.0
    %v175 = vmul.f32 %v171, 0.01
    %v176 = vsel %vm174, %v171, %v175
    %v177 = vld [vmem:[#allocation7] sm:$0xff]
    %v178 = vld [vmem:[#allocation7 + $0x8] sm:$0xff]
    %v179 = vld [vmem:[#allocation7 + $0x10] sm:$0xff]
    %v180 = vld [vmem:[#allocation7 + $0x18] sm:$0xff]
    %v181 = vld [vmem:[#allocation7 + $0x20] sm:$0xff]
    %v182 = vld [vmem:[#allocation7 + $0x28] sm:$0xff]
    %v183 = vld [vmem:[#allocation7 + $0x30] sm:$0xff]
    %v184 = vld [vmem:[#allocation7 + $0x38] sm:$0xff]
    %v185 = vld [vmem:[#allocation7 + $0x40] sm:$0xff]
    %v186 = vld [vmem:[#allocation7 + $0x48] sm:$0xff]
    %v187 = vld [vmem:[#allocation7 + $0x50] sm:$0xff]
    %v188 = vld [vmem:[#allocation7 + $0x58] sm:$0xff]
    %v189 = vld [vmem:[#allocation7 + $0x60] sm:$0xff]
    %v190 = vld [vmem:[#allocation7 + $0x68] sm:$0xff]
    %v191 = vld [vmem:[#allocation7 + $0x70] sm:$0xff]
    %v192 = vld [vmem:[#allocation7 + $0x78] sm:$0xff]
    %v193 = vld [vmem:[%s4] sm:$0x1]
    %v195 = vlaneseq
    %v196 = vshrl.u32 %v195, 7
    %v197 = vsub.s32 0, %v196
    %v198 = vrot.slane %v193, %v197
    %200 = vmatprep.subr.mxu0 0.0
    %201 = vmatpush1.msra.mxu0 %v177
    %202 = vmatprep.subr.mxu0 0.0
    %203 = vmatpush1.msra.mxu0 %v178
    %204 = vmatprep.subr.mxu0 0.0
    %205 = vmatpush1.msra.mxu0 %v179
    %206 = vmatprep.subr.mxu0 0.0
    %207 = vmatpush1.msra.mxu0 %v180
    %208 = vmatprep.subr.mxu0 0.0
    %209 = vmatpush1.msra.mxu0 %v181
    %210 = vmatprep.subr.mxu0 0.0
    %211 = vmatpush1.msra.mxu0 %v182
    %212 = vmatprep.subr.mxu0 0.0
    %213 = vmatpush1.msra.mxu0 %v183
    %214 = vmatprep.subr.mxu0 0.0
    %215 = vmatpush1.msra.mxu0 %v184
    %216 = vmatprep.subr.mxu0 0.0
    %217 = vmatpush1.msra.mxu0 %v185
    %218 = vmatprep.subr.mxu0 0.0
    %219 = vmatpush1.msra.mxu0 %v186
    %220 = vmatprep.subr.mxu0 0.0
    %221 = vmatpush1.msra.mxu0 %v187
    %222 = vmatprep.subr.mxu0 0.0
    %223 = vmatpush1.msra.mxu0 %v188
    %224 = vmatprep.subr.mxu0 0.0
    %225 = vmatpush1.msra.mxu0 %v189
    %226 = vmatprep.subr.mxu0 0.0
    %227 = vmatpush1.msra.mxu0 %v190
    %228 = vmatprep.subr.mxu0 0.0
    %229 = vmatpush1.msra.mxu0 %v191
    %230 = vmatprep.subr.mxu0 0.0
    %231 = vmatpush1.msra.mxu0 %v192
    %232 = vmatprep.subr.mxu0 0.0
    %233 = vmatpush1.msra.mxu0 0.0
    %234 = vmatprep.subr.mxu0 0.0
    %235 = vmatpush1.msra.mxu0 0.0
    %236 = vmatprep.subr.mxu0 0.0
    %237 = vmatpush1.msra.mxu0 0.0
    %238 = vmatprep.subr.mxu0 0.0
    %239 = vmatpush1.msra.mxu0 0.0
    %240 = vmatprep.subr.mxu0 0.0
    %241 = vmatpush1.msra.mxu0 0.0
    %242 = vmatprep.subr.mxu0 0.0
    %243 = vmatpush1.msra.mxu0 0.0
    %244 = vmatprep.subr.mxu0 0.0
    %245 = vmatpush1.msra.mxu0 0.0
    %246 = vmatprep.subr.mxu0 0.0
    %247 = vmatpush1.msra.mxu0 0.0
    %248 = vmatprep.subr.mxu0 0.0
    %249 = vmatpush1.msra.mxu0 0.0
    %250 = vmatprep.subr.mxu0 0.0
    %251 = vmatpush1.msra.mxu0 0.0
    %252 = vmatprep.subr.mxu0 0.0
    %253 = vmatpush1.msra.mxu0 0.0
    %254 = vmatprep.subr.mxu0 0.0
    %255 = vmatpush1.msra.mxu0 0.0
    %256 = vmatprep.subr.mxu0 0.0
    %257 = vmatpush1.msra.mxu0 0.0
    %258 = vmatprep.subr.mxu0 0.0
    %259 = vmatpush1.msra.mxu0 0.0
    %260 = vmatprep.subr.mxu0 0.0
    %261 = vmatpush1.msra.mxu0 0.0
    %262 = vmatprep.subr.mxu0 0.0
    %263 = vmatpush1.msra.mxu0 0.0
    %264 = vmatprep.mubr.f32.mxu0 0.0
    %265 = vmatmul.mubr.f32.gmra.mrb[0].mxu0 %v176
    %v266 = vpop.f32.mrb[0].mxu0
    %v267 = vadd.f32 %v198, %v266
    %v268 = vpop.f32.mrb[0].mxu0
    %269 = vdwg.mxu0
    %vm270 = vcmp.gt.f32.partialorder %v267, 0.0
    %v271 = vmul.f32 %v267, 0.01
    %v272 = vsel %vm270, %v267, %v271
    %273 = vmatprep.subr.mxu0 0.0
    %274 = vmatpush1.msra.mxu0 %v177
    %275 = vmatprep.subr.mxu0 0.0
    %276 = vmatpush1.msra.mxu0 %v178
    %277 = vmatprep.subr.mxu0 0.0
    %278 = vmatpush1.msra.mxu0 %v179
    %279 = vmatprep.subr.mxu0 0.0
    %280 = vmatpush1.msra.mxu0 %v180
    %281 = vmatprep.subr.mxu0 0.0
    %282 = vmatpush1.msra.mxu0 %v181
    %283 = vmatprep.subr.mxu0 0.0
    %284 = vmatpush1.msra.mxu0 %v182
    %285 = vmatprep.subr.mxu0 0.0
    %286 = vmatpush1.msra.mxu0 %v183
    %287 = vmatprep.subr.mxu0 0.0
    %288 = vmatpush1.msra.mxu0 %v184
    %289 = vmatprep.subr.mxu0 0.0
    %290 = vmatpush1.msra.mxu0 %v185
    %291 = vmatprep.subr.mxu0 0.0
    %292 = vmatpush1.msra.mxu0 %v186
    %293 = vmatprep.subr.mxu0 0.0
    %294 = vmatpush1.msra.mxu0 %v187
    %295 = vmatprep.subr.mxu0 0.0
    %296 = vmatpush1.msra.mxu0 %v188
    %297 = vmatprep.subr.mxu0 0.0
    %298 = vmatpush1.msra.mxu0 %v189
    %299 = vmatprep.subr.mxu0 0.0
    %300 = vmatpush1.msra.mxu0 %v190
    %301 = vmatprep.subr.mxu0 0.0
    %302 = vmatpush1.msra.mxu0 %v191
    %303 = vmatprep.subr.mxu0 0.0
    %304 = vmatpush1.msra.mxu0 %v192
    %305 = vmatprep.subr.mxu0 0.0
    %306 = vmatpush1.msra.mxu0 0.0
    %307 = vmatprep.subr.mxu0 0.0
    %308 = vmatpush1.msra.mxu0 0.0
    %309 = vmatprep.subr.mxu0 0.0
    %310 = vmatpush1.msra.mxu0 0.0
    %311 = vmatprep.subr.mxu0 0.0
    %312 = vmatpush1.msra.mxu0 0.0
    %313 = vmatprep.subr.mxu0 0.0
    %314 = vmatpush1.msra.mxu0 0.0
    %315 = vmatprep.subr.mxu0 0.0
    %316 = vmatpush1.msra.mxu0 0.0
    %317 = vmatprep.subr.mxu0 0.0
    %318 = vmatpush1.msra.mxu0 0.0
    %319 = vmatprep.subr.mxu0 0.0
    %320 = vmatpush1.msra.mxu0 0.0
    %321 = vmatprep.subr.mxu0 0.0
    %322 = vmatpush1.msra.mxu0 0.0
    %323 = vmatprep.subr.mxu0 0.0
    %324 = vmatpush1.msra.mxu0 0.0
    %325 = vmatprep.subr.mxu0 0.0
    %326 = vmatpush1.msra.mxu0 0.0
    %327 = vmatprep.subr.mxu0 0.0
    %328 = vmatpush1.msra.mxu0 0.0
    %329 = vmatprep.subr.mxu0 0.0
    %330 = vmatpush1.msra.mxu0 0.0
    %331 = vmatprep.subr.mxu0 0.0
    %332 = vmatpush1.msra.mxu0 0.0
    %333 = vmatprep.subr.mxu0 0.0
    %334 = vmatpush1.msra.mxu0 0.0
    %335 = vmatprep.subr.mxu0 0.0
    %336 = vmatpush1.msra.mxu0 0.0
    %337 = vmatprep.mubr.f32.mxu0 0.0
    %338 = vmatmul.mubr.f32.gmra.mrb[0].mxu0 %v272
    %v339 = vpop.f32.mrb[0].mxu0
    %v340 = vadd.f32 %v198, %v339
    %v341 = vpop.f32.mrb[0].mxu0
    %342 = vdwg.mxu0
    %vm343 = vcmp.gt.f32.partialorder %v340, 0.0
    %v344 = vmul.f32 %v340, 0.01
    %v345 = vsel %vm343, %v340, %v344
    %346 = vmatprep.subr.mxu0 0.0
    %347 = vmatpush1.msra.mxu0 %v177
    %348 = vmatprep.subr.mxu0 0.0
    %349 = vmatpush1.msra.mxu0 %v178
    %350 = vmatprep.subr.mxu0 0.0
    %351 = vmatpush1.msra.mxu0 %v179
    %352 = vmatprep.subr.mxu0 0.0
    %353 = vmatpush1.msra.mxu0 %v180
    %354 = vmatprep.subr.mxu0 0.0
    %355 = vmatpush1.msra.mxu0 %v181
    %356 = vmatprep.subr.mxu0 0.0
    %357 = vmatpush1.msra.mxu0 %v182
    %358 = vmatprep.subr.mxu0 0.0
    %359 = vmatpush1.msra.mxu0 %v183
    %360 = vmatprep.subr.mxu0 0.0
    %361 = vmatpush1.msra.mxu0 %v184
    %362 = vmatprep.subr.mxu0 0.0
    %363 = vmatpush1.msra.mxu0 %v185
    %364 = vmatprep.subr.mxu0 0.0
    %365 = vmatpush1.msra.mxu0 %v186
    %366 = vmatprep.subr.mxu0 0.0
    %367 = vmatpush1.msra.mxu0 %v187
    %368 = vmatprep.subr.mxu0 0.0
    %369 = vmatpush1.msra.mxu0 %v188
    %370 = vmatprep.subr.mxu0 0.0
    %371 = vmatpush1.msra.mxu0 %v189
    %372 = vmatprep.subr.mxu0 0.0
    %373 = vmatpush1.msra.mxu0 %v190
    %374 = vmatprep.subr.mxu0 0.0
    %375 = vmatpush1.msra.mxu0 %v191
    %376 = vmatprep.subr.mxu0 0.0
    %377 = vmatpush1.msra.mxu0 %v192
    %378 = vmatprep.subr.mxu0 0.0
    %379 = vmatpush1.msra.mxu0 0.0
    %380 = vmatprep.subr.mxu0 0.0
    %381 = vmatpush1.msra.mxu0 0.0
    %382 = vmatprep.subr.mxu0 0.0
    %383 = vmatpush1.msra.mxu0 0.0
    %384 = vmatprep.subr.mxu0 0.0
    %385 = vmatpush1.msra.mxu0 0.0
    %386 = vmatprep.subr.mxu0 0.0
    %387 = vmatpush1.msra.mxu0 0.0
    %388 = vmatprep.subr.mxu0 0.0
    %389 = vmatpush1.msra.mxu0 0.0
    %390 = vmatprep.subr.mxu0 0.0
    %391 = vmatpush1.msra.mxu0 0.0
    %392 = vmatprep.subr.mxu0 0.0
    %393 = vmatpush1.msra.mxu0 0.0
    %394 = vmatprep.subr.mxu0 0.0
    %395 = vmatpush1.msra.mxu0 0.0
    %396 = vmatprep.subr.mxu0 0.0
    %397 = vmatpush1.msra.mxu0 0.0
    %398 = vmatprep.subr.mxu0 0.0
    %399 = vmatpush1.msra.mxu0 0.0
    %400 = vmatprep.subr.mxu0 0.0
    %401 = vmatpush1.msra.mxu0 0.0
    %402 = vmatprep.subr.mxu0 0.0
    %403 = vmatpush1.msra.mxu0 0.0
    %404 = vmatprep.subr.mxu0 0.0
    %405 = vmatpush1.msra.mxu0 0.0
    %406 = vmatprep.subr.mxu0 0.0
    %407 = vmatpush1.msra.mxu0 0.0
    %408 = vmatprep.subr.mxu0 0.0
    %409 = vmatpush1.msra.mxu0 0.0
    %410 = vmatprep.mubr.f32.mxu0 0.0
    %411 = vmatmul.mubr.f32.gmra.mrb[0].mxu0 %v345
    %v412 = vpop.f32.mrb[0].mxu0
    %v413 = vadd.f32 %v198, %v412
    %v414 = vpop.f32.mrb[0].mxu0
    %415 = vdwg.mxu0
    %vm416 = vcmp.gt.f32.partialorder %v413, 0.0
    %v417 = vmul.f32 %v413, 0.01
    %v418 = vsel %vm416, %v413, %v417
    %v419 = vld [vmem:[#allocation8] sm:$0xff]
    %v420 = vld [vmem:[#allocation8 + $0x8] sm:$0xff]
    %v421 = vld [vmem:[#allocation8 + $0x10] sm:$0xff]
    %v422 = vld [vmem:[#allocation8 + $0x18] sm:$0xff]
    %v423 = vld [vmem:[#allocation8 + $0x20] sm:$0xff]
    %v424 = vld [vmem:[#allocation8 + $0x28] sm:$0xff]
    %v425 = vld [vmem:[#allocation8 + $0x30] sm:$0xff]
    %v426 = vld [vmem:[#allocation8 + $0x38] sm:$0xff]
    %v427 = vld [vmem:[#allocation8 + $0x40] sm:$0xff]
    %v428 = vld [vmem:[#allocation8 + $0x48] sm:$0xff]
    %v429 = vld [vmem:[#allocation8 + $0x50] sm:$0xff]
    %v430 = vld [vmem:[#allocation8 + $0x58] sm:$0xff]
    %v431 = vld [vmem:[#allocation8 + $0x60] sm:$0xff]
    %v432 = vld [vmem:[#allocation8 + $0x68] sm:$0xff]
    %v433 = vld [vmem:[#allocation8 + $0x70] sm:$0xff]
    %v434 = vld [vmem:[#allocation8 + $0x78] sm:$0xff]
    %v435 = vld [vmem:[%s6] sm:$0x1]
    %v437 = vlaneseq
    %v438 = vshrl.u32 %v437, 7
    %v439 = vsub.s32 0, %v438
    %v440 = vrot.slane %v435, %v439
    %442 = vmatprep.subr.mxu0 0.0
    %443 = vmatpush1.msra.mxu0 %v419
    %444 = vmatprep.subr.mxu0 0.0
    %445 = vmatpush1.msra.mxu0 %v420
    %446 = vmatprep.subr.mxu0 0.0
    %447 = vmatpush1.msra.mxu0 %v421
    %448 = vmatprep.subr.mxu0 0.0
    %449 = vmatpush1.msra.mxu0 %v422
    %450 = vmatprep.subr.mxu0 0.0
    %451 = vmatpush1.msra.mxu0 %v423
    %452 = vmatprep.subr.mxu0 0.0
    %453 = vmatpush1.msra.mxu0 %v424
    %454 = vmatprep.subr.mxu0 0.0
    %455 = vmatpush1.msra.mxu0 %v425
    %456 = vmatprep.subr.mxu0 0.0
    %457 = vmatpush1.msra.mxu0 %v426
    %458 = vmatprep.subr.mxu0 0.0
    %459 = vmatpush1.msra.mxu0 %v427
    %460 = vmatprep.subr.mxu0 0.0
    %461 = vmatpush1.msra.mxu0 %v428
    %462 = vmatprep.subr.mxu0 0.0
    %463 = vmatpush1.msra.mxu0 %v429
    %464 = vmatprep.subr.mxu0 0.0
    %465 = vmatpush1.msra.mxu0 %v430
    %466 = vmatprep.subr.mxu0 0.0
    %467 = vmatpush1.msra.mxu0 %v431
    %468 = vmatprep.subr.mxu0 0.0
    %469 = vmatpush1.msra.mxu0 %v432
    %470 = vmatprep.subr.mxu0 0.0
    %471 = vmatpush1.msra.mxu0 %v433
    %472 = vmatprep.subr.mxu0 0.0
    %473 = vmatpush1.msra.mxu0 %v434
    %474 = vmatprep.subr.mxu0 0.0
    %475 = vmatpush1.msra.mxu0 0.0
    %476 = vmatprep.subr.mxu0 0.0
    %477 = vmatpush1.msra.mxu0 0.0
    %478 = vmatprep.subr.mxu0 0.0
    %479 = vmatpush1.msra.mxu0 0.0
    %480 = vmatprep.subr.mxu0 0.0
    %481 = vmatpush1.msra.mxu0 0.0
    %482 = vmatprep.subr.mxu0 0.0
    %483 = vmatpush1.msra.mxu0 0.0
    %484 = vmatprep.subr.mxu0 0.0
    %485 = vmatpush1.msra.mxu0 0.0
    %486 = vmatprep.subr.mxu0 0.0
    %487 = vmatpush1.msra.mxu0 0.0
    %488 = vmatprep.subr.mxu0 0.0
    %489 = vmatpush1.msra.mxu0 0.0
    %490 = vmatprep.subr.mxu0 0.0
    %491 = vmatpush1.msra.mxu0 0.0
    %492 = vmatprep.subr.mxu0 0.0
    %493 = vmatpush1.msra.mxu0 0.0
    %494 = vmatprep.subr.mxu0 0.0
    %495 = vmatpush1.msra.mxu0 0.0
    %496 = vmatprep.subr.mxu0 0.0
    %497 = vmatpush1.msra.mxu0 0.0
    %498 = vmatprep.subr.mxu0 0.0
    %499 = vmatpush1.msra.mxu0 0.0
    %500 = vmatprep.subr.mxu0 0.0
    %501 = vmatpush1.msra.mxu0 0.0
    %502 = vmatprep.subr.mxu0 0.0
    %503 = vmatpush1.msra.mxu0 0.0
    %504 = vmatprep.subr.mxu0 0.0
    %505 = vmatpush1.msra.mxu0 0.0
    %506 = vmatprep.mubr.f32.mxu0 0.0
    %507 = vmatmul.mubr.f32.gmra.mrb[0].mxu0 %v418
    %v508 = vpop.f32.mrb[0].mxu0
    %v509 = vadd.f32 %v440, %v508
    %v510 = vpop.f32.mrb[0].mxu0
    %511 = vdwg.mxu0
    %512 = vst [vmem:[#allocation10] sm:$0xff] %v509
    // Predicated region
    $region46: #{tpu_custom_call.1} parent=1 // pred_check
      _
    $region47: #{tpu_custom_call.1} parent=1 // pred_check_branch
      %514 = sbr.rel (0) target = $region49
    $region48: #{tpu_custom_call.1} parent=1 // pred_region
      %s516 = ssub.s32 128, 128
      %517 = vsyncadd [#allocation4], %s516
      %s519 = sshll.u32 [#allocation10], 4
      %s520 = int_to_ptr.vmem [resolvable:$true] %s519
      %522 = dma.vmem_to_hbm [thread:$0]  %s520, 128, %s7, [#allocation4]
    $region49: #{tpu_custom_call.1} parent=1 // pred_fallthru
      _
    // Predicated region
    $region50: #{tpu_custom_call.1} parent=1 // pred_check
      _
    $region51: #{tpu_custom_call.1} parent=1 // pred_check_branch
      %524 = sbr.rel (0) target = $region53
    $region52: #{tpu_custom_call.1} parent=1 // pred_region
      %525 = dma.done [#allocation4], 128
    $region53: #{tpu_custom_call.1} parent=1 // pred_fallthru
      _
    %526 = vsyncpa [#allocation3], 1
    %527 = vsyncpa [#allocation6], 1
    %528 = vsyncpa [#allocation9], 1
    %529 = vsyncpa [#allocation4], 1

</llo_original>
